<compile_context>
chip_gen: v5e
topology: v5e:2x2
jax: 0.10.0
libtpu: 0.0.40
codegen_flags: <defaults>
</compile_context>

<pallas_src>
import jax
import jax.numpy as jnp
from jax.experimental import pallas as pl
from jax.experimental.pallas import tpu as pltpu


def _embedding_lookup_kernel(idx_ref, table_ref, out_ref):
    """One-hot matmul gather of embedding rows.

    idx_ref   : VMEM ref, shape (B, 1), int32        -- domain indices
    table_ref : VMEM ref, shape (N, D), f32/bf16     -- embedding weight
    out_ref   : VMEM ref, shape (B, D), same as table -- gathered features
    """
    B = out_ref.shape[0]
    N = table_ref.shape[0]

    idx = idx_ref[...]                                           # (B, 1) int32
    iota = jax.lax.broadcasted_iota(jnp.int32, (B, N), 1)        # (B, N)
    one_hot = (idx == iota).astype(table_ref.dtype)              # (B, N)

    # Single MXU op (B<=128, N<=128 fits one vmatmul on every generation).
    # precision=HIGHEST => gathered rows are bit-exact table rows (no bf16
    # single-pass rounding), and results match across chip generations.
    gathered = jax.lax.dot_general(
        one_hot,
        table_ref[...],
        dimension_numbers=(((1,), (0,)), ((), ())),
        precision=jax.lax.Precision.HIGHEST,
        preferred_element_type=jnp.float32,
    )
    out_ref[...] = gathered.astype(out_ref.dtype)                # one unmasked store


def _sublane_tile(dtype) -> int:
    """Sublane tile (second-to-last dim granularity) for a given dtype."""
    itemsize = jnp.dtype(dtype).itemsize
    return {4: 8, 2: 16, 1: 32}.get(itemsize, 8)


def domain_embedding_forward(domains, embedding_table):
    """Pallas implementation of DomainEmbedding.forward.

    domains:          int array of shape (B,)
    embedding_table:  (n_domains, domain_dim) f32 (or bf16) weight
    returns:          dict with 'domain-feature' of shape (B, domain_dim)
    """
    if domains.dtype != jnp.int32:
        # Prefer casting at data-prep time; this is a no-op when already int32.
        domains = domains.astype(jnp.int32)

    B = domains.shape[0]
    n_domains, domain_dim = embedding_table.shape

    # Pad batch up to one sublane tile of the output dtype so the output store
    # is a full unmasked vreg store and the matmul shape is MXU-friendly.
    tile = _sublane_tile(embedding_table.dtype)
    B_pad = ((B + tile - 1) // tile) * tile
    idx_2d = domains.reshape(B, 1)
    if B_pad != B:
        idx_2d = jnp.pad(idx_2d, ((0, B_pad - B), (0, 0)))

    itemsize = jnp.dtype(embedding_table.dtype).itemsize
    cost = pl.CostEstimate(
        flops=2 * B_pad * n_domains * domain_dim,
        transcendentals=0,
        bytes_accessed=(
            n_domains * domain_dim * itemsize      # table in
            + B_pad * 4                            # indices in
            + B_pad * domain_dim * itemsize        # features out
        ),
    )

    feat_padded = pl.pallas_call(
        _embedding_lookup_kernel,
        out_shape=jax.ShapeDtypeStruct((B_pad, domain_dim), embedding_table.dtype),
        in_specs=[
            pl.BlockSpec(memory_space=pltpu.MemorySpace.VMEM),   # (B_pad,1) indices
            pl.BlockSpec(memory_space=pltpu.MemorySpace.VMEM),   # full table
        ],
        out_specs=pl.BlockSpec(memory_space=pltpu.MemorySpace.VMEM),
        cost_estimate=cost,
    )(idx_2d, embedding_table)

    # Padded rows gather row 0; they are sliced off here — keep this slice.
    feat = feat_padded[:B] if B_pad != B else feat_padded
    return {"domain-feature": feat}


if __name__ == "__main__":
    # Module hyper-parameters (small, consistent with the module's __init__).
    n_domains = 16
    domain_dim = 128   # lane-dense last dim (multiple of 128)
    batch = 8

    key = jax.random.PRNGKey(0)
    k_w, k_idx = jax.random.split(key)

    # nn.Embedding default init: N(0, 1) weights of shape (n_domains, domain_dim).
    embedding_table = jax.random.normal(
        k_w, (n_domains, domain_dim), dtype=jnp.float32
    )

    # batch['domains']: integer domain ids of shape (B,), int32 at data-prep time.
    domains = jax.random.randint(k_idx, (batch,), 0, n_domains, dtype=jnp.int32)

    out = domain_embedding_forward(domains, embedding_table)
    feat = jax.block_until_ready(out["domain-feature"])

    # Correctness check against plain-JAX reference (same semantics as torch
    # Embedding). With precision=HIGHEST the gather is bit-exact.
    ref = jnp.take(embedding_table, domains, axis=0)
    assert feat.shape == (batch, domain_dim)
    assert jnp.array_equal(feat, ref), "mismatch vs reference gather"

    print("KERNEL_OK")
</pallas_src>

<mosaic_0001>
module attributes {stable_mosaic.version = 11 : i64} {
  func.func @_embedding_lookup_kernel(%arg0: memref<8x1xi32, #tpu.memory_space<vmem>>, %arg1: memref<16x128xf32, #tpu.memory_space<vmem>>, %arg2: memref<8x128xf32, #tpu.memory_space<vmem>>) attributes {dimension_semantics = [], scalar_prefetch = 0 : i64, scratch_operands = 0 : i64, tpu.core_type = #tpu.core_type<tc>} {
    %c0 = arith.constant 0 : index
    %c0_0 = arith.constant 0 : index
    %0 = vector.load %arg0[%c0, %c0_0] : memref<8x1xi32, #tpu.memory_space<vmem>>, vector<8x1xi32>
    %1 = tpu.iota {dimensions = array<i32: 1>} : vector<8x16xi32>
    %2 = vector.broadcast %0 : vector<8x1xi32> to vector<8x16xi32>
    %3 = arith.cmpi eq, %2, %1 : vector<8x16xi32>
    %4 = arith.extui %3 : vector<8x16xi1> to vector<8x16xi32>
    %5 = arith.sitofp %4 : vector<8x16xi32> to vector<8x16xf32>
    %c0_1 = arith.constant 0 : index
    %c0_2 = arith.constant 0 : index
    %6 = vector.load %arg1[%c0_1, %c0_2] : memref<16x128xf32, #tpu.memory_space<vmem>>, vector<16x128xf32>
    %cst = arith.constant dense<0.000000e+00> : vector<8x128xf32>
    %7 = tpu.matmul %5, %6, %cst {dimension_numbers = #tpu.dot_dimension_numbers<[1], [0], [0], [1], [0, 0, 1, 1], [], []>, precision = #tpu.contract_precision<fp32>} : vector<8x16xf32>, vector<16x128xf32>, vector<8x128xf32> -> vector<8x128xf32>
    %c0_3 = arith.constant 0 : index
    %c0_4 = arith.constant 0 : index
    %8 = vector.load %arg2[%c0_3, %c0_4] : memref<8x128xf32, #tpu.memory_space<vmem>>, vector<8x128xf32>
    tpu.vector_store %arg2[%c0_3, %c0_4], %7 {strides = array<i32>} : memref<8x128xf32, #tpu.memory_space<vmem>>, vector<8x128xf32>,
    return
  }
}

</mosaic_0001>

<llo_original>
// kernel: tpu_custom_call.1
$region0: #{tpu_custom_call.1}
  #allocation0 [shape = 'u32[]', space=smem, size = 0x4, offset = 0x4, fixed_abs, tag = 'smem constant byte address 0x4 - core index']
  #allocation1 [shape = 'u32[72,128]{1,0:T(1,128)}', space=vmem, size = 0x9000, scoped, tag = 'internal scratch']
  %s0 = inlined_call_operand.vmem [shape: s32[8,1], index: 0, kind: input, shape index: {}]
  %s1 = inlined_call_operand.hbm [shape: f32[16,128], index: 1, kind: input, shape index: {}]
  %s2 = inlined_call_operand.hbm [shape: f32[8,128], index: 2, kind: output, shape index: {}]
  %s3 = sld [smem:[#allocation0]]
  $region22: #{tpu_custom_call.1} parent=0
    _
  %s5 = ssub.s32 1, %s3
  %s6 = scalar_select 0, %s5, %s3
  $region1: #{tpu_custom_call.1} parent=0
    #allocation2 [shape = 'u8[8192]{0}', space=vmem, size = 0x2000, scoped, tag = 'input window, operand 1, single buffered']
    #allocation3 [shape = 's32[1]{0}', space=sflag, size = 0x4, scoped, tag = 'scoped memory for tpu_custom_call.1']
    #allocation4 [shape = 's32[1]{0}', space=sflag, size = 0x4, scoped, tag = 'scoped memory for tpu_custom_call.1']
    #allocation5 [shape = 'u8[4096]{0}', space=vmem, size = 0x1000, scoped, tag = 'output window, operand 0, single buffered']
    %7 = vsyncpa [#allocation3], 0
    %8 = vsyncpa [#allocation4], 0
    // Predicated region
    $region2: #{tpu_custom_call.1} parent=1 // pred_check
      _
    $region3: #{tpu_custom_call.1} parent=1 // pred_check_branch
      %10 = sbr.rel (0) target = $region5
    $region4: #{tpu_custom_call.1} parent=1 // pred_region
      _
    $region5: #{tpu_custom_call.1} parent=1 // pred_fallthru
      _
    // Predicated region
    $region6: #{tpu_custom_call.1} parent=1 // pred_check
      _
    $region7: #{tpu_custom_call.1} parent=1 // pred_check_branch
      %12 = sbr.rel (0) target = $region9
    $region8: #{tpu_custom_call.1} parent=1 // pred_region
      %14 = vsyncadd [#allocation3], 0
      %s15 = sshll.u32 %s1, 4
      %s16 = int_to_ptr.hbm [resolvable:$true] %s15
      %s17 = sshll.u32 [#allocation2], 4
      %s18 = int_to_ptr.vmem [resolvable:$true] %s17
      %23 = dma.hbm_to_vmem [thread:$0]  %s16, 256, %s18, [#allocation3], 128, 128, 8
    $region9: #{tpu_custom_call.1} parent=1 // pred_fallthru
      _
    // Predicated region
    $region10: #{tpu_custom_call.1} parent=1 // pred_check
      _
    $region11: #{tpu_custom_call.1} parent=1 // pred_check_branch
      %25 = sbr.rel (0) target = $region13
    $region12: #{tpu_custom_call.1} parent=1 // pred_region
      %27 = dma.done [#allocation3], 256
    $region13: #{tpu_custom_call.1} parent=1 // pred_fallthru
      _
    %v28 = vld [vmem:[%s0] sm:$0xff]
    %v29 = vlaneseq
    %v30 = vand.u32 %v29, 127
    %31 = vset.pattern.permute.xlu0 0
    %32 = vperm.xlu0 %31, %v28
    %v33 = vpop.permute.xlu0 %32
    %vm34 = vcmp.eq.s32.totalorder %v33, %v30
    %v35 = vsel %vm34, 1, 0
    %v36 = vcvt.s32.f32 %v35
    %v37 = vld [vmem:[#allocation2] sm:$0xff]
    %v38 = vld [vmem:[#allocation2 + $0x8] sm:$0xff]
    %vm39 = vcmask 130048
    %v41 = vsel %vm39, %v36, 0
    %43 = vmatpush.msra.mxu0 0.0
    %44 = vmatpush.msra.mxu0 0.0
    %45 = vmatpush.msra.mxu0 0.0
    %46 = vmatpush.msra.mxu0 0.0
    %47 = vmatpush.msra.mxu0 0.0
    %48 = vmatpush.msra.mxu0 0.0
    %49 = vmatpush.msra.mxu0 0.0
    %50 = vmatpush.msra.mxu0 0.0
    %51 = vmatpush.msra.mxu0 0.0
    %52 = vmatpush.msra.mxu0 0.0
    %53 = vmatpush.msra.mxu0 0.0
    %54 = vmatpush.msra.mxu0 0.0
    %55 = vmatpush.msra.mxu0 0.0
    %56 = vmatpush.msra.mxu0 0.0
    %v57 = vand.u32 %v38, 4294901760
    %58 = vmatpush.msra.mxu0 %v57
    %v59 = vand.u32 %v37, 4294901760
    %60 = vmatpush.msra.mxu0 %v59
    %v61 = vand.u32 %v41, 4294901760
    %v62 = vsub.f32 %v41, %v61
    %v63 = vand.u32 %v62, 4294901760
    %v64 = vsub.f32 %v62, %v63
    %v65 = vand.u32 %v64, 4294901760
    %66 = vmatmul.f32.gmra.mxu0 %v65
    %v67 = vpop.f32.mrf.mxu0
    %v68 = vadd.f32 0.0, %v67
    %69 = vdwg.mxu0
    %70 = vmatpush.msra.mxu0 0.0
    %71 = vmatpush.msra.mxu0 0.0
    %72 = vmatpush.msra.mxu0 0.0
    %73 = vmatpush.msra.mxu0 0.0
    %74 = vmatpush.msra.mxu0 0.0
    %75 = vmatpush.msra.mxu0 0.0
    %76 = vmatpush.msra.mxu0 0.0
    %77 = vmatpush.msra.mxu0 0.0
    %78 = vmatpush.msra.mxu0 0.0
    %79 = vmatpush.msra.mxu0 0.0
    %80 = vmatpush.msra.mxu0 0.0
    %81 = vmatpush.msra.mxu0 0.0
    %82 = vmatpush.msra.mxu0 0.0
    %83 = vmatpush.msra.mxu0 0.0
    %v84 = vand.u32 %v38, 4294901760
    %v85 = vsub.f32 %v38, %v84
    %v86 = vand.u32 %v85, 4294901760
    %v87 = vsub.f32 %v85, %v86
    %v88 = vand.u32 %v87, 4294901760
    %89 = vmatpush.msra.mxu0 %v88
    %v90 = vand.u32 %v37, 4294901760
    %v91 = vsub.f32 %v37, %v90
    %v92 = vand.u32 %v91, 4294901760
    %v93 = vsub.f32 %v91, %v92
    %v94 = vand.u32 %v93, 4294901760
    %95 = vmatpush.msra.mxu0 %v94
    %v96 = vand.u32 %v41, 4294901760
    %97 = vmatmul.f32.gmra.mxu0 %v96
    %v98 = vpop.f32.mrf.mxu0
    %v99 = vadd.f32 %v68, %v98
    %100 = vdwg.mxu0
    %101 = vmatpush.msra.mxu0 0.0
    %102 = vmatpush.msra.mxu0 0.0
    %103 = vmatpush.msra.mxu0 0.0
    %104 = vmatpush.msra.mxu0 0.0
    %105 = vmatpush.msra.mxu0 0.0
    %106 = vmatpush.msra.mxu0 0.0
    %107 = vmatpush.msra.mxu0 0.0
    %108 = vmatpush.msra.mxu0 0.0
    %109 = vmatpush.msra.mxu0 0.0
    %110 = vmatpush.msra.mxu0 0.0
    %111 = vmatpush.msra.mxu0 0.0
    %112 = vmatpush.msra.mxu0 0.0
    %113 = vmatpush.msra.mxu0 0.0
    %114 = vmatpush.msra.mxu0 0.0
    %v115 = vand.u32 %v38, 4294901760
    %v116 = vsub.f32 %v38, %v115
    %117 = vmatpush.msra.mxu0 %v116
    %v118 = vand.u32 %v37, 4294901760
    %v119 = vsub.f32 %v37, %v118
    %120 = vmatpush.msra.mxu0 %v119
    %v121 = vand.u32 %v41, 4294901760
    %v122 = vsub.f32 %v41, %v121
    %123 = vmatmul.f32.gmra.mxu0 %v122
    %v124 = vpop.f32.mrf.mxu0
    %v125 = vadd.f32 %v99, %v124
    %126 = vdwg.mxu0
    %127 = vmatpush.msra.mxu0 0.0
    %128 = vmatpush.msra.mxu0 0.0
    %129 = vmatpush.msra.mxu0 0.0
    %130 = vmatpush.msra.mxu0 0.0
    %131 = vmatpush.msra.mxu0 0.0
    %132 = vmatpush.msra.mxu0 0.0
    %133 = vmatpush.msra.mxu0 0.0
    %134 = vmatpush.msra.mxu0 0.0
    %135 = vmatpush.msra.mxu0 0.0
    %136 = vmatpush.msra.mxu0 0.0
    %137 = vmatpush.msra.mxu0 0.0
    %138 = vmatpush.msra.mxu0 0.0
    %139 = vmatpush.msra.mxu0 0.0
    %140 = vmatpush.msra.mxu0 0.0
    %v141 = vand.u32 %v38, 4294901760
    %142 = vmatpush.msra.mxu0 %v141
    %v143 = vand.u32 %v37, 4294901760
    %144 = vmatpush.msra.mxu0 %v143
    %v145 = vand.u32 %v41, 4294901760
    %v146 = vsub.f32 %v41, %v145
    %v147 = vand.u32 %v146, 4294901760
    %148 = vmatmul.f32.gmra.mxu0 %v147
    %v149 = vpop.f32.mrf.mxu0
    %v150 = vadd.f32 %v125, %v149
    %151 = vdwg.mxu0
    %152 = vmatpush.msra.mxu0 0.0
    %153 = vmatpush.msra.mxu0 0.0
    %154 = vmatpush.msra.mxu0 0.0
    %155 = vmatpush.msra.mxu0 0.0
    %156 = vmatpush.msra.mxu0 0.0
    %157 = vmatpush.msra.mxu0 0.0
    %158 = vmatpush.msra.mxu0 0.0
    %159 = vmatpush.msra.mxu0 0.0
    %160 = vmatpush.msra.mxu0 0.0
    %161 = vmatpush.msra.mxu0 0.0
    %162 = vmatpush.msra.mxu0 0.0
    %163 = vmatpush.msra.mxu0 0.0
    %164 = vmatpush.msra.mxu0 0.0
    %165 = vmatpush.msra.mxu0 0.0
    %v166 = vand.u32 %v38, 4294901760
    %v167 = vsub.f32 %v38, %v166
    %v168 = vand.u32 %v167, 4294901760
    %169 = vmatpush.msra.mxu0 %v168
    %v170 = vand.u32 %v37, 4294901760
    %v171 = vsub.f32 %v37, %v170
    %v172 = vand.u32 %v171, 4294901760
    %173 = vmatpush.msra.mxu0 %v172
    %v174 = vand.u32 %v41, 4294901760
    %175 = vmatmul.f32.gmra.mxu0 %v174
    %v176 = vpop.f32.mrf.mxu0
    %v177 = vadd.f32 %v150, %v176
    %178 = vdwg.mxu0
    %179 = vmatpush.msra.mxu0 0.0
    %180 = vmatpush.msra.mxu0 0.0
    %181 = vmatpush.msra.mxu0 0.0
    %182 = vmatpush.msra.mxu0 0.0
    %183 = vmatpush.msra.mxu0 0.0
    %184 = vmatpush.msra.mxu0 0.0
    %185 = vmatpush.msra.mxu0 0.0
    %186 = vmatpush.msra.mxu0 0.0
    %187 = vmatpush.msra.mxu0 0.0
    %188 = vmatpush.msra.mxu0 0.0
    %189 = vmatpush.msra.mxu0 0.0
    %190 = vmatpush.msra.mxu0 0.0
    %191 = vmatpush.msra.mxu0 0.0
    %192 = vmatpush.msra.mxu0 0.0
    %v193 = vand.u32 %v38, 4294901760
    %194 = vmatpush.msra.mxu0 %v193
    %v195 = vand.u32 %v37, 4294901760
    %196 = vmatpush.msra.mxu0 %v195
    %v197 = vand.u32 %v41, 4294901760
    %198 = vmatmul.f32.gmra.mxu0 %v197
    %v199 = vpop.f32.mrf.mxu0
    %v200 = vadd.f32 %v177, %v199
    %201 = vdwg.mxu0
    %202 = vst [vmem:[#allocation5] sm:$0xff] %v200
    // Predicated region
    $region14: #{tpu_custom_call.1} parent=1 // pred_check
      _
    $region15: #{tpu_custom_call.1} parent=1 // pred_check_branch
      %204 = sbr.rel (0) target = $region17
    $region16: #{tpu_custom_call.1} parent=1 // pred_region
      %206 = vsyncadd [#allocation4], 0
      %s208 = sshll.u32 [#allocation5], 4
      %s209 = int_to_ptr.vmem [resolvable:$true] %s208
      %s210 = sshll.u32 %s2, 4
      %s211 = int_to_ptr.hbm [resolvable:$true] %s210
      %213 = dma.vmem_to_hbm [thread:$0]  %s209, 128, %s211, [#allocation4]
    $region17: #{tpu_custom_call.1} parent=1 // pred_fallthru
      _
    // Predicated region
    $region18: #{tpu_custom_call.1} parent=1 // pred_check
      _
    $region19: #{tpu_custom_call.1} parent=1 // pred_check_branch
      %215 = sbr.rel (0) target = $region21
    $region20: #{tpu_custom_call.1} parent=1 // pred_region
      %217 = dma.done [#allocation4], 128
    $region21: #{tpu_custom_call.1} parent=1 // pred_fallthru
      _
    %218 = vsyncpa [#allocation3], 1
    %219 = vsyncpa [#allocation4], 1

</llo_original>
